<compile_context>
chip_gen: v6e
topology: v6e:2x2x1
jax: 0.10.0
libtpu: 0.0.40
codegen_flags: <defaults>
</compile_context>

<pallas_src>
import functools

import jax
import jax.numpy as jnp
from jax.experimental import pallas as pl
from jax.experimental.pallas import tpu as pltpu


LANE = 128      # TPU lane width
SUBLANE = 16    # sublane pack for bf16 tiles (also covers f32's 8)


def _round_up(x, m):
    return (x + m - 1) // m * m


def mlp_kernel(x_ref, w1_ref, b1_ref, w2_ref, b2_ref, o_ref):
    # x_ref : (TM, IN)       f32   (cast to bf16 in-kernel; HBM carries f32 once)
    # w1_ref: (IN, H_PAD)    bf16   b1_ref: (1, H_PAD)    f32
    # w2_ref: (H_PAD, O_PAD) bf16   b2_ref: (1, O_PAD)    f32
    # o_ref : (TM, O_PAD)    bf16
    x = x_ref[...].astype(jnp.bfloat16)
    h = jnp.dot(x, w1_ref[...], preferred_element_type=jnp.float32)
    h = jnp.maximum(h + b1_ref[...], 0.0)                     # bias + ReLU in f32 (VPU)
    out = jnp.dot(h.astype(jnp.bfloat16), w2_ref[...],
                  preferred_element_type=jnp.float32)
    o_ref[...] = (out + b2_ref[...]).astype(o_ref.dtype)      # bf16 lane-dense store


def prepare_params(w1, b1, w2, b2):
    """Pad narrow dims to a full lane and cast weights to bf16. Call ONCE at init."""
    hidden = w1.shape[1]
    out_size = w2.shape[1]
    h_pad = _round_up(hidden, LANE)
    o_pad = _round_up(out_size, LANE)
    w1p = jnp.pad(w1, ((0, 0), (0, h_pad - hidden))).astype(jnp.bfloat16)
    b1p = jnp.pad(b1, ((0, 0), (0, h_pad - hidden))).astype(jnp.float32)
    w2p = jnp.pad(w2, ((0, h_pad - hidden), (0, o_pad - out_size))).astype(jnp.bfloat16)
    b2p = jnp.pad(b2, ((0, 0), (0, o_pad - out_size))).astype(jnp.float32)
    return (w1p, b1p, w2p, b2p), out_size


def mnist_model_forward(x_nchw, params, out_size, *, tm_target=2048):
    """Forward pass of MnistModel.

    x_nchw: (B, C, H, W) float32; params: output of prepare_params.
    Returns (B, out_size) float32 logits.
    """
    w1p, b1p, w2p, b2p = params
    B = x_nchw.shape[0]
    x_flat = x_nchw.reshape(B, -1).astype(jnp.float32)          # xb.view(xb.size(0), -1)
    in_size = x_flat.shape[1]
    h_pad = w1p.shape[1]
    o_pad = w2p.shape[1]

    # Pad batch only to the sublane pack; ragged last tile handled by cdiv grid.
    b_padded = _round_up(B, SUBLANE)
    xp = jnp.pad(x_flat, ((0, b_padded - B), (0, 0))) if b_padded != B else x_flat

    # Batch tile: big enough to amortize per-step overhead, capped so double-buffered
    # f32 x blocks stay under v7x's 32 MiB scoped VMEM (tm=4096 f32 ~ 26 MB), and
    # shrunk so the grid has >=2 steps when possible (keeps both v7x TCs busy).
    two_step_tm = _round_up(pl.cdiv(b_padded, 2), SUBLANE)
    tm = max(SUBLANE, min(tm_target, 4096, two_step_tm))
    grid = (pl.cdiv(b_padded, tm),)

    out = pl.pallas_call(
        mlp_kernel,
        out_shape=jax.ShapeDtypeStruct((b_padded, o_pad), jnp.bfloat16),
        grid_spec=pltpu.PrefetchScalarGridSpec(
            num_scalar_prefetch=0,
            grid=grid,
            in_specs=[
                pl.BlockSpec((tm, in_size), lambda i: (i, 0)),      # x: tiled over batch
                pl.BlockSpec((in_size, h_pad), lambda i: (0, 0)),   # weights: VMEM-resident
                pl.BlockSpec((1, h_pad), lambda i: (0, 0)),
                pl.BlockSpec((h_pad, o_pad), lambda i: (0, 0)),
                pl.BlockSpec((1, o_pad), lambda i: (0, 0)),
            ],
            out_specs=pl.BlockSpec((tm, o_pad), lambda i: (i, 0)),  # lane-dense bf16 store
        ),
        compiler_params=pltpu.CompilerParams(
            # Batch steps are independent -> shard across both TCs on v7x.
            dimension_semantics=("parallel",),
        ),
    )(xp, w1p, b1p, w2p, b2p)

    return out[:B, :out_size].astype(jnp.float32)


def init_params(key, in_size, hidden_size, out_size):
    """Deterministic init mimicking nn.Linear's U(-1/sqrt(fan_in), 1/sqrt(fan_in))."""
    k1, k2, k3, k4 = jax.random.split(key, 4)
    bound1 = 1.0 / jnp.sqrt(in_size)
    bound2 = 1.0 / jnp.sqrt(hidden_size)
    # stored as (in, out) == PyTorch weight.T
    w1 = jax.random.uniform(k1, (in_size, hidden_size), jnp.float32, -bound1, bound1)
    b1 = jax.random.uniform(k2, (1, hidden_size), jnp.float32, -bound1, bound1)
    w2 = jax.random.uniform(k3, (hidden_size, out_size), jnp.float32, -bound2, bound2)
    b2 = jax.random.uniform(k4, (1, out_size), jnp.float32, -bound2, bound2)
    return w1, b1, w2, b2


if __name__ == "__main__":
    # MNIST-shaped but small batch: (B, 1, 28, 28) -> in_size = 784
    B, C, H, W = 8, 1, 28, 28
    in_size = C * H * W
    hidden_size = 32
    out_size = 10

    key = jax.random.PRNGKey(0)
    kx, kp = jax.random.split(key)
    x = jax.random.normal(kx, (B, C, H, W), dtype=jnp.float32)
    w1, b1, w2, b2 = init_params(kp, in_size, hidden_size, out_size)

    # Hoisted one-time weight prep (padding + bf16 cast).
    params, n_out = prepare_params(w1, b1, w2, b2)

    fwd = jax.jit(functools.partial(mnist_model_forward, out_size=n_out))
    logits = jax.block_until_ready(fwd(x, params))
    assert logits.shape == (B, out_size)

    # Reference with the same bf16-input / f32-accumulate / bf16-store numerics.
    x_flat = x.reshape(B, -1)
    h_ref = jnp.maximum(
        jnp.dot(x_flat.astype(jnp.bfloat16), w1.astype(jnp.bfloat16),
                preferred_element_type=jnp.float32) + b1, 0.0)
    ref = jnp.dot(h_ref.astype(jnp.bfloat16), w2.astype(jnp.bfloat16),
                  preferred_element_type=jnp.float32) + b2
    ref = ref.astype(jnp.bfloat16).astype(jnp.float32)
    assert jnp.allclose(logits, ref, atol=2e-2, rtol=2e-2), (
        jnp.max(jnp.abs(logits - ref)))

    # Sanity: bf16 path stays close to the pure-f32 math too.
    ref_f32 = jnp.maximum(x_flat @ w1 + b1, 0.0) @ w2 + b2
    assert jnp.allclose(logits, ref_f32, atol=5e-2, rtol=5e-2)

    print("KERNEL_OK")
</pallas_src>

<mosaic_0001>
module attributes {stable_mosaic.version = 11 : i64} {
  func.func @mlp_kernel(%arg0: i32, %arg1: memref<16x784xf32, #tpu.memory_space<vmem>>, %arg2: memref<784x128xbf16, #tpu.memory_space<vmem>>, %arg3: memref<1x128xf32, #tpu.memory_space<vmem>>, %arg4: memref<128x128xbf16, #tpu.memory_space<vmem>>, %arg5: memref<1x128xf32, #tpu.memory_space<vmem>>, %arg6: memref<16x128xbf16, #tpu.memory_space<vmem>>) attributes {dimension_semantics = [#tpu.dimension_semantics<parallel>], iteration_bounds = array<i64: 1>, scalar_prefetch = 0 : i64, scratch_operands = 0 : i64, tpu.core_type = #tpu.core_type<tc>, window_params = [{transform_indices = @transform_0, window_bounds = array<i64: 16, 784>}, {pipeline_mode = #tpu.pipeline_mode<synchronous>, transform_indices = @transform_1, window_bounds = array<i64: 784, 128>}, {pipeline_mode = #tpu.pipeline_mode<synchronous>, transform_indices = @transform_2, window_bounds = array<i64: 1, 128>}, {pipeline_mode = #tpu.pipeline_mode<synchronous>, transform_indices = @transform_3, window_bounds = array<i64: 128, 128>}, {pipeline_mode = #tpu.pipeline_mode<synchronous>, transform_indices = @transform_4, window_bounds = array<i64: 1, 128>}, {transform_indices = @transform_5, window_bounds = array<i64: 16, 128>}]} {
    %c0 = arith.constant 0 : index
    %c0_0 = arith.constant 0 : index
    %0 = vector.load %arg1[%c0, %c0_0] : memref<16x784xf32, #tpu.memory_space<vmem>>, vector<16x784xf32>
    %1 = arith.truncf %0 : vector<16x784xf32> to vector<16x784xbf16>
    %c0_1 = arith.constant 0 : index
    %c0_2 = arith.constant 0 : index
    %2 = vector.load %arg2[%c0_1, %c0_2] : memref<784x128xbf16, #tpu.memory_space<vmem>>, vector<784x128xbf16>
    %cst = arith.constant dense<0.000000e+00> : vector<16x128xf32>
    %3 = tpu.matmul %1, %2, %cst {dimension_numbers = #tpu.dot_dimension_numbers<[1], [0], [0], [1], [0, 0, 1, 1], [], []>} : vector<16x784xbf16>, vector<784x128xbf16>, vector<16x128xf32> -> vector<16x128xf32>
    %c0_3 = arith.constant 0 : index
    %c0_4 = arith.constant 0 : index
    %4 = vector.load %arg3[%c0_3, %c0_4] : memref<1x128xf32, #tpu.memory_space<vmem>>, vector<1x128xf32>
    %5 = vector.broadcast %4 : vector<1x128xf32> to vector<16x128xf32>
    %6 = arith.addf %3, %5 : vector<16x128xf32>
    %cst_5 = arith.constant 0.000000e+00 : f32
    %7 = vector.broadcast %cst_5 : f32 to vector<16x128xf32>
    %8 = arith.maximumf %6, %7 : vector<16x128xf32>
    %9 = arith.truncf %8 : vector<16x128xf32> to vector<16x128xbf16>
    %c0_6 = arith.constant 0 : index
    %c0_7 = arith.constant 0 : index
    %10 = vector.load %arg4[%c0_6, %c0_7] : memref<128x128xbf16, #tpu.memory_space<vmem>>, vector<128x128xbf16>
    %cst_8 = arith.constant dense<0.000000e+00> : vector<16x128xf32>
    %11 = tpu.matmul %9, %10, %cst_8 {dimension_numbers = #tpu.dot_dimension_numbers<[1], [0], [0], [1], [0, 0, 1, 1], [], []>} : vector<16x128xbf16>, vector<128x128xbf16>, vector<16x128xf32> -> vector<16x128xf32>
    %c0_9 = arith.constant 0 : index
    %c0_10 = arith.constant 0 : index
    %12 = vector.load %arg5[%c0_9, %c0_10] : memref<1x128xf32, #tpu.memory_space<vmem>>, vector<1x128xf32>
    %13 = vector.broadcast %12 : vector<1x128xf32> to vector<16x128xf32>
    %14 = arith.addf %11, %13 : vector<16x128xf32>
    %15 = arith.truncf %14 : vector<16x128xf32> to vector<16x128xbf16>
    %c0_11 = arith.constant 0 : index
    %c0_12 = arith.constant 0 : index
    %16 = vector.load %arg6[%c0_11, %c0_12] : memref<16x128xbf16, #tpu.memory_space<vmem>>, vector<16x128xbf16>
    tpu.vector_store %arg6[%c0_11, %c0_12], %15 {strides = array<i32>} : memref<16x128xbf16, #tpu.memory_space<vmem>>, vector<16x128xbf16>,
    return
  }
  func.func @transform_0(%arg0: i32) -> (i32, i32) {
    %c0_i32 = arith.constant 0 : i32
    %c0_i32_0 = arith.constant 0 : i32
    return %arg0, %c0_i32 : i32, i32
  }
  func.func @transform_1(%arg0: i32) -> (i32, i32) {
    %c0_i32 = arith.constant 0 : i32
    %c0_i32_0 = arith.constant 0 : i32
    %c0_i32_1 = arith.constant 0 : i32
    return %c0_i32, %c0_i32_0 : i32, i32
  }
  func.func @transform_2(%arg0: i32) -> (i32, i32) {
    %c0_i32 = arith.constant 0 : i32
    %c0_i32_0 = arith.constant 0 : i32
    %c0_i32_1 = arith.constant 0 : i32
    return %c0_i32, %c0_i32_0 : i32, i32
  }
  func.func @transform_3(%arg0: i32) -> (i32, i32) {
    %c0_i32 = arith.constant 0 : i32
    %c0_i32_0 = arith.constant 0 : i32
    %c0_i32_1 = arith.constant 0 : i32
    return %c0_i32, %c0_i32_0 : i32, i32
  }
  func.func @transform_4(%arg0: i32) -> (i32, i32) {
    %c0_i32 = arith.constant 0 : i32
    %c0_i32_0 = arith.constant 0 : i32
    %c0_i32_1 = arith.constant 0 : i32
    return %c0_i32, %c0_i32_0 : i32, i32
  }
  func.func @transform_5(%arg0: i32) -> (i32, i32) {
    %c0_i32 = arith.constant 0 : i32
    %c0_i32_0 = arith.constant 0 : i32
    return %arg0, %c0_i32 : i32, i32
  }
}

</mosaic_0001>

<llo_original>
// kernel: mnist_model_forward.1
$region0: #{mnist_model_forward.1}
  #allocation0 [shape = 'u32[]', space=smem, size = 0x4, offset = 0x4, fixed_abs, tag = 'smem constant byte address 0x4 - core index']
  #allocation1 [shape = 'u32[144,128]{1,0:T(1,128)}', space=vmem, size = 0x12000, scoped, tag = 'internal scratch']
  %s0 = inlined_call_operand.vmem [shape: f32[16,784], index: 0, kind: input, shape index: {}]
  %s1 = inlined_call_operand.vmem [shape: bf16[784,128], index: 1, kind: input, shape index: {}]
  %s2 = inlined_call_operand.vmem [shape: f32[1,128], index: 2, kind: input, shape index: {}]
  %s3 = inlined_call_operand.vmem [shape: bf16[128,128], index: 3, kind: input, shape index: {}]
  %s4 = inlined_call_operand.vmem [shape: f32[1,128], index: 4, kind: input, shape index: {}]
  %s5 = inlined_call_operand.vmem [shape: bf16[16,128], index: 5, kind: output, shape index: {}]
  %s6 = sld [smem:[#allocation0]]
  $region30: #{mnist_model_forward.1} parent=0
    _
  %s8 = ssub.s32 1, %s6
  %s9 = scalar_select 0, %s8, %s6
  // Predicated region
  $region2: #{mnist_model_forward.1} parent=0 // pred_check
    _
  $region3: #{mnist_model_forward.1} parent=0 // pred_check_branch
    %11 = sbr.rel (0) target = $region5
  $region4: #{mnist_model_forward.1} parent=0 // pred_region
    _
  $region5: #{mnist_model_forward.1} parent=0 // pred_fallthru
    _
  // Predicated region
  $region6: #{mnist_model_forward.1} parent=0 // pred_check
    _
  $region7: #{mnist_model_forward.1} parent=0 // pred_check_branch
    %13 = sbr.rel (0) target = $region9
  $region8: #{mnist_model_forward.1} parent=0 // pred_region
    _
  $region9: #{mnist_model_forward.1} parent=0 // pred_fallthru
    _
  // Predicated region
  $region10: #{mnist_model_forward.1} parent=0 // pred_check
    _
  $region11: #{mnist_model_forward.1} parent=0 // pred_check_branch
    %15 = sbr.rel (0) target = $region13
  $region12: #{mnist_model_forward.1} parent=0 // pred_region
    _
  $region13: #{mnist_model_forward.1} parent=0 // pred_fallthru
    _
  // Predicated region
  $region14: #{mnist_model_forward.1} parent=0 // pred_check
    _
  $region15: #{mnist_model_forward.1} parent=0 // pred_check_branch
    %17 = sbr.rel (0) target = $region17
  $region16: #{mnist_model_forward.1} parent=0 // pred_region
    _
  $region17: #{mnist_model_forward.1} parent=0 // pred_fallthru
    _
  // Predicated region
  $region18: #{mnist_model_forward.1} parent=0 // pred_check
    _
  $region19: #{mnist_model_forward.1} parent=0 // pred_check_branch
    %19 = sbr.rel (0) target = $region21
  $region20: #{mnist_model_forward.1} parent=0 // pred_region
    _
  $region21: #{mnist_model_forward.1} parent=0 // pred_fallthru
    _
  %v21 = vld [vmem:[%s0] sm:$0xff]
  %v22 = vld [vmem:[%s0 + $0x8] sm:$0xff]
  %v23 = vld [vmem:[%s0 + $0x10] sm:$0xff]
  %v24 = vld [vmem:[%s0 + $0x18] sm:$0xff]
  %v25 = vld [vmem:[%s0 + $0x20] sm:$0xff]
  %v26 = vld [vmem:[%s0 + $0x28] sm:$0xff]
  %v27 = vld [vmem:[%s0 + $0x30] sm:$0xff]
  %v28 = vld [vmem:[%s0 + $0x38] sm:$0xff]
  %v29 = vld [vmem:[%s0 + $0x40] sm:$0xff]
  %v30 = vld [vmem:[%s0 + $0x48] sm:$0xff]
  %v31 = vld [vmem:[%s0 + $0x50] sm:$0xff]
  %v32 = vld [vmem:[%s0 + $0x58] sm:$0xff]
  %v33 = vld [vmem:[%s0 + $0x60] sm:$0xff]
  %v34 = vld [vmem:[%s0 + $0x68] sm:$0xff]
  %v35 = vpack.c.bf16 %v28, %v21
  %v36 = vpack.c.bf16 %v29, %v22
  %v37 = vpack.c.bf16 %v30, %v23
  %v38 = vpack.c.bf16 %v31, %v24
  %v39 = vpack.c.bf16 %v32, %v25
  %v40 = vpack.c.bf16 %v33, %v26
  %v41 = vpack.c.bf16 %v34, %v27
  %v42 = vld [vmem:[%s1] sm:$0xf]
  %v43 = vld [vmem:[%s1 + $0x4] sm:$0xf]
  %v44 = vld [vmem:[%s1 + $0x8] sm:$0xf]
  %v45 = vld [vmem:[%s1 + $0xc] sm:$0xf]
  %v46 = vld [vmem:[%s1 + $0x10] sm:$0xf]
  %v47 = vld [vmem:[%s1 + $0x14] sm:$0xf]
  %v48 = vld [vmem:[%s1 + $0x18] sm:$0xf]
  %v49 = vld [vmem:[%s1 + $0x1c] sm:$0xf]
  %v50 = vld [vmem:[%s1 + $0x20] sm:$0xf]
  %v51 = vld [vmem:[%s1 + $0x24] sm:$0xf]
  %v52 = vld [vmem:[%s1 + $0x28] sm:$0xf]
  %v53 = vld [vmem:[%s1 + $0x2c] sm:$0xf]
  %v54 = vld [vmem:[%s1 + $0x30] sm:$0xf]
  %v55 = vld [vmem:[%s1 + $0x34] sm:$0xf]
  %v56 = vld [vmem:[%s1 + $0x38] sm:$0xf]
  %v57 = vld [vmem:[%s1 + $0x3c] sm:$0xf]
  %v58 = vld [vmem:[%s1 + $0x40] sm:$0xf]
  %v59 = vld [vmem:[%s1 + $0x44] sm:$0xf]
  %v60 = vld [vmem:[%s1 + $0x48] sm:$0xf]
  %v61 = vld [vmem:[%s1 + $0x4c] sm:$0xf]
  %v62 = vld [vmem:[%s1 + $0x50] sm:$0xf]
  %v63 = vld [vmem:[%s1 + $0x54] sm:$0xf]
  %v64 = vld [vmem:[%s1 + $0x58] sm:$0xf]
  %v65 = vld [vmem:[%s1 + $0x5c] sm:$0xf]
  %v66 = vld [vmem:[%s1 + $0x60] sm:$0xf]
  %v67 = vld [vmem:[%s1 + $0x64] sm:$0xf]
  %v68 = vld [vmem:[%s1 + $0x68] sm:$0xf]
  %v69 = vld [vmem:[%s1 + $0x6c] sm:$0xf]
  %v70 = vld [vmem:[%s1 + $0x70] sm:$0xf]
  %v71 = vld [vmem:[%s1 + $0x74] sm:$0xf]
  %v72 = vld [vmem:[%s1 + $0x78] sm:$0xf]
  %v73 = vld [vmem:[%s1 + $0x7c] sm:$0xf]
  %v74 = vld [vmem:[%s1 + $0x80] sm:$0xf]
  %v75 = vld [vmem:[%s1 + $0x84] sm:$0xf]
  %v76 = vld [vmem:[%s1 + $0x88] sm:$0xf]
  %v77 = vld [vmem:[%s1 + $0x8c] sm:$0xf]
  %v78 = vld [vmem:[%s1 + $0x90] sm:$0xf]
  %v79 = vld [vmem:[%s1 + $0x94] sm:$0xf]
  %v80 = vld [vmem:[%s1 + $0x98] sm:$0xf]
  %v81 = vld [vmem:[%s1 + $0x9c] sm:$0xf]
  %v82 = vld [vmem:[%s1 + $0xa0] sm:$0xf]
  %v83 = vld [vmem:[%s1 + $0xa4] sm:$0xf]
  %v84 = vld [vmem:[%s1 + $0xa8] sm:$0xf]
  %v85 = vld [vmem:[%s1 + $0xac] sm:$0xf]
  %v86 = vld [vmem:[%s1 + $0xb0] sm:$0xf]
  %v87 = vld [vmem:[%s1 + $0xb4] sm:$0xf]
  %v88 = vld [vmem:[%s1 + $0xb8] sm:$0xf]
  %v89 = vld [vmem:[%s1 + $0xbc] sm:$0xf]
  %v90 = vld [vmem:[%s1 + $0xc0] sm:$0xf]
  %v91 = vld [vmem:[%s1 + $0xc4] sm:$0xf]
  %v92 = vld [vmem:[%s1 + $0xc8] sm:$0xf]
  %v93 = vld [vmem:[%s1 + $0xcc] sm:$0xf]
  %v94 = vld [vmem:[%s1 + $0xd0] sm:$0xf]
  %v95 = vld [vmem:[%s1 + $0xd4] sm:$0xf]
  %v96 = vld [vmem:[%s1 + $0xd8] sm:$0xf]
  %v97 = vld [vmem:[%s1 + $0xdc] sm:$0xf]
  %v98 = vld [vmem:[%s1 + $0xe0] sm:$0xf]
  %v99 = vld [vmem:[%s1 + $0xe4] sm:$0xf]
  %v100 = vld [vmem:[%s1 + $0xe8] sm:$0xf]
  %v101 = vld [vmem:[%s1 + $0xec] sm:$0xf]
  %v102 = vld [vmem:[%s1 + $0xf0] sm:$0xf]
  %v103 = vld [vmem:[%s1 + $0xf4] sm:$0xf]
  %v104 = vld [vmem:[%s1 + $0xf8] sm:$0xf]
  %v105 = vld [vmem:[%s1 + $0xfc] sm:$0xf]
  %v106 = vld [vmem:[%s1 + $0x100] sm:$0xf]
  %v107 = vld [vmem:[%s1 + $0x104] sm:$0xf]
  %v108 = vld [vmem:[%s1 + $0x108] sm:$0xf]
  %v109 = vld [vmem:[%s1 + $0x10c] sm:$0xf]
  %v110 = vld [vmem:[%s1 + $0x110] sm:$0xf]
  %v111 = vld [vmem:[%s1 + $0x114] sm:$0xf]
  %v112 = vld [vmem:[%s1 + $0x118] sm:$0xf]
  %v113 = vld [vmem:[%s1 + $0x11c] sm:$0xf]
  %v114 = vld [vmem:[%s1 + $0x120] sm:$0xf]
  %v115 = vld [vmem:[%s1 + $0x124] sm:$0xf]
  %v116 = vld [vmem:[%s1 + $0x128] sm:$0xf]
  %v117 = vld [vmem:[%s1 + $0x12c] sm:$0xf]
  %v118 = vld [vmem:[%s1 + $0x130] sm:$0xf]
  %v119 = vld [vmem:[%s1 + $0x134] sm:$0xf]
  %v120 = vld [vmem:[%s1 + $0x138] sm:$0xf]
  %v121 = vld [vmem:[%s1 + $0x13c] sm:$0xf]
  %v122 = vld [vmem:[%s1 + $0x140] sm:$0xf]
  %v123 = vld [vmem:[%s1 + $0x144] sm:$0xf]
  %v124 = vld [vmem:[%s1 + $0x148] sm:$0xf]
  %v125 = vld [vmem:[%s1 + $0x14c] sm:$0xf]
  %v126 = vld [vmem:[%s1 + $0x150] sm:$0xf]
  %v127 = vld [vmem:[%s1 + $0x154] sm:$0xf]
  %v128 = vld [vmem:[%s1 + $0x158] sm:$0xf]
  %v129 = vld [vmem:[%s1 + $0x15c] sm:$0xf]
  %v130 = vld [vmem:[%s1 + $0x160] sm:$0xf]
  %v131 = vld [vmem:[%s1 + $0x164] sm:$0xf]
  %v132 = vld [vmem:[%s1 + $0x168] sm:$0xf]
  %v133 = vld [vmem:[%s1 + $0x16c] sm:$0xf]
  %v134 = vld [vmem:[%s1 + $0x170] sm:$0xf]
  %v135 = vld [vmem:[%s1 + $0x174] sm:$0xf]
  %v136 = vld [vmem:[%s1 + $0x178] sm:$0xf]
  %v137 = vld [vmem:[%s1 + $0x17c] sm:$0xf]
  %v138 = vld [vmem:[%s1 + $0x180] sm:$0xf]
  %v139 = vld [vmem:[%s1 + $0x184] sm:$0xf]
  %v140 = vld [vmem:[%s2] sm:$0x1]
  %v142 = vlaneseq
  %v143 = vshrl.u32 %v142, 7
  %v144 = vsub.s32 0, %v143
  %v145 = vrot.slane %v140, %v144
  %v245 = vunpack.c.l.b16 %v42
  %v246 = vunpack.c.l.b16 %v43
  %v247 = vunpack.c.l.b16 %v44
  %v248 = vunpack.c.l.b16 %v45
  %v249 = vunpack.c.l.b16 %v46
  %v250 = vunpack.c.l.b16 %v47
  %v251 = vunpack.c.l.b16 %v48
  %v252 = vunpack.c.l.b16 %v49
  %v253 = vunpack.c.l.b16 %v50
  %v254 = vunpack.c.l.b16 %v51
  %v255 = vunpack.c.l.b16 %v52
  %v256 = vunpack.c.l.b16 %v53
  %v257 = vunpack.c.l.b16 %v54
  %v258 = vunpack.c.l.b16 %v55
  %v259 = vunpack.c.l.b16 %v56
  %v260 = vunpack.c.l.b16 %v57
  %v261 = vunpack.c.l.b16 %v58
  %v262 = vunpack.c.l.b16 %v59
  %v263 = vunpack.c.l.b16 %v60
  %v264 = vunpack.c.l.b16 %v61
  %v265 = vunpack.c.l.b16 %v62
  %v266 = vunpack.c.l.b16 %v63
  %v267 = vunpack.c.l.b16 %v64
  %v268 = vunpack.c.l.b16 %v65
  %v269 = vunpack.c.l.b16 %v66
  %v270 = vunpack.c.l.b16 %v67
  %v271 = vunpack.c.l.b16 %v68
  %v272 = vunpack.c.l.b16 %v69
  %v273 = vunpack.c.l.b16 %v70
  %v274 = vunpack.c.l.b16 %v71
  %v275 = vunpack.c.l.b16 %v72
  %v276 = vunpack.c.l.b16 %v73
  %v277 = vunpack.c.l.b16 %v74
  %v278 = vunpack.c.l.b16 %v75
  %v279 = vunpack.c.l.b16 %v76
  %v280 = vunpack.c.l.b16 %v77
  %v281 = vunpack.c.l.b16 %v78
  %v282 = vunpack.c.l.b16 %v79
  %v283 = vunpack.c.l.b16 %v80
  %v284 = vunpack.c.l.b16 %v81
  %v285 = vunpack.c.l.b16 %v82
  %v286 = vunpack.c.l.b16 %v83
  %v287 = vunpack.c.l.b16 %v84
  %v288 = vunpack.c.l.b16 %v85
  %v289 = vunpack.c.l.b16 %v86
  %v290 = vunpack.c.l.b16 %v87
  %v291 = vunpack.c.l.b16 %v88
  %v292 = vunpack.c.l.b16 %v89
  %v293 = vunpack.c.l.b16 %v90
  %v294 = vunpack.c.l.b16 %v91
  %v295 = vunpack.c.l.b16 %v92
  %v296 = vunpack.c.l.b16 %v93
  %v297 = vunpack.c.l.b16 %v94
  %v298 = vunpack.c.l.b16 %v95
  %v299 = vunpack.c.l.b16 %v96
  %v300 = vunpack.c.l.b16 %v97
  %v301 = vunpack.c.l.b16 %v98
  %v302 = vunpack.c.l.b16 %v99
  %v303 = vunpack.c.l.b16 %v100
  %v304 = vunpack.c.l.b16 %v101
  %v305 = vunpack.c.l.b16 %v102
  %v306 = vunpack.c.l.b16 %v103
  %v307 = vunpack.c.l.b16 %v104
  %v308 = vunpack.c.l.b16 %v105
  %v309 = vunpack.c.l.b16 %v106
  %v310 = vunpack.c.l.b16 %v107
  %v311 = vunpack.c.l.b16 %v108
  %v312 = vunpack.c.l.b16 %v109
  %v313 = vunpack.c.l.b16 %v110
  %v314 = vunpack.c.l.b16 %v111
  %v315 = vunpack.c.l.b16 %v112
  %v316 = vunpack.c.l.b16 %v113
  %v317 = vunpack.c.l.b16 %v114
  %v318 = vunpack.c.l.b16 %v115
  %v319 = vunpack.c.l.b16 %v116
  %v320 = vunpack.c.l.b16 %v117
  %v321 = vunpack.c.l.b16 %v118
  %v322 = vunpack.c.l.b16 %v119
  %v323 = vunpack.c.l.b16 %v120
  %v324 = vunpack.c.l.b16 %v121
  %v325 = vunpack.c.l.b16 %v122
  %v326 = vunpack.c.l.b16 %v123
  %v327 = vunpack.c.l.b16 %v124
  %v328 = vunpack.c.l.b16 %v125
  %v329 = vunpack.c.l.b16 %v126
  %v330 = vunpack.c.l.b16 %v127
  %v331 = vunpack.c.l.b16 %v128
  %v332 = vunpack.c.l.b16 %v129
  %v333 = vunpack.c.l.b16 %v130
  %v334 = vunpack.c.l.b16 %v131
  %v335 = vunpack.c.l.b16 %v132
  %v336 = vunpack.c.l.b16 %v133
  %v337 = vunpack.c.l.b16 %v134
  %v338 = vunpack.c.l.b16 %v135
  %v339 = vunpack.c.l.b16 %v136
  %v340 = vunpack.c.l.b16 %v137
  %v341 = vunpack.c.l.b16 %v138
  %v342 = vunpack.c.l.b16 %v139
  %v343 = vpack.c.b16 %v246, %v245
  %v344 = vpack.c.b16 %v248, %v247
  %v345 = vpack.c.b16 %v250, %v249
  %v346 = vpack.c.b16 %v252, %v251
  %v347 = vpack.c.b16 %v254, %v253
  %v348 = vpack.c.b16 %v256, %v255
  %v349 = vpack.c.b16 %v258, %v257
  %v350 = vpack.c.b16 %v260, %v259
  %v351 = vpack.c.b16 %v262, %v261
  %v352 = vpack.c.b16 %v264, %v263
  %v353 = vpack.c.b16 %v266, %v265
  %v354 = vpack.c.b16 %v268, %v267
  %v355 = vpack.c.b16 %v270, %v269
  %v356 = vpack.c.b16 %v272, %v271
  %v357 = vpack.c.b16 %v274, %v273
  %v358 = vpack.c.b16 %v276, %v275
  %v359 = vpack.c.b16 %v278, %v277
  %v360 = vpack.c.b16 %v280, %v279
  %v361 = vpack.c.b16 %v282, %v281
  %v362 = vpack.c.b16 %v284, %v283
  %v363 = vpack.c.b16 %v286, %v285
  %v364 = vpack.c.b16 %v288, %v287
  %v365 = vpack.c.b16 %v290, %v289
  %v366 = vpack.c.b16 %v292, %v291
  %v367 = vpack.c.b16 %v294, %v293
  %v368 = vpack.c.b16 %v296, %v295
  %v369 = vpack.c.b16 %v298, %v297
  %v370 = vpack.c.b16 %v300, %v299
  %v371 = vpack.c.b16 %v302, %v301
  %v372 = vpack.c.b16 %v304, %v303
  %v373 = vpack.c.b16 %v306, %v305
  %v374 = vpack.c.b16 %v308, %v307
  %v375 = vpack.c.b16 %v310, %v309
  %v376 = vpack.c.b16 %v312, %v311
  %v377 = vpack.c.b16 %v314, %v313
  %v378 = vpack.c.b16 %v316, %v315
  %v379 = vpack.c.b16 %v318, %v317
  %v380 = vpack.c.b16 %v320, %v319
  %v381 = vpack.c.b16 %v322, %v321
  %v382 = vpack.c.b16 %v324, %v323
  %v383 = vpack.c.b16 %v326, %v325
  %v384 = vpack.c.b16 %v328, %v327
  %v385 = vpack.c.b16 %v330, %v329
  %v386 = vpack.c.b16 %v332, %v331
  %v387 = vpack.c.b16 %v334, %v333
  %v388 = vpack.c.b16 %v336, %v335
  %v389 = vpack.c.b16 %v338, %v337
  %v390 = vpack.c.b16 %v340, %v339
  %v391 = vpack.c.b16 %v342, %v341
  %vm441 = vcmask 130048
  %v443 = vsel %vm441, %v41, 0
  %445 = vmatprep.subr.bf16.mxu0 0
  %446 = vmatpush1.bf16.msra.mxu0 %v350
  %447 = vmatprep.subr.bf16.mxu0 0
  %448 = vmatpush1.bf16.msra.mxu0 %v349
  %449 = vmatprep.subr.bf16.mxu0 0
  %450 = vmatpush1.bf16.msra.mxu0 %v348
  %451 = vmatprep.subr.bf16.mxu0 0
  %452 = vmatpush1.bf16.msra.mxu0 %v347
  %453 = vmatprep.subr.bf16.mxu0 0
  %454 = vmatpush1.bf16.msra.mxu0 %v346
  %455 = vmatprep.subr.bf16.mxu0 0
  %456 = vmatpush1.bf16.msra.mxu0 %v345
  %457 = vmatprep.subr.bf16.mxu0 0
  %458 = vmatpush1.bf16.msra.mxu0 %v344
  %459 = vmatprep.subr.bf16.mxu0 0
  %460 = vmatpush1.bf16.msra.mxu0 %v343
  %461 = vmatprep.subr.bf16.mxu0 0
  %462 = vmatpush2.bf16.msra.mxu0 %v358
  %463 = vmatprep.subr.bf16.mxu0 0
  %464 = vmatpush2.bf16.msra.mxu0 %v357
  %465 = vmatprep.subr.bf16.mxu0 0
  %466 = vmatpush2.bf16.msra.mxu0 %v356
  %467 = vmatprep.subr.bf16.mxu0 0
  %468 = vmatpush2.bf16.msra.mxu0 %v355
  %469 = vmatprep.subr.bf16.mxu0 0
  %470 = vmatpush2.bf16.msra.mxu0 %v354
  %471 = vmatprep.subr.bf16.mxu0 0
  %472 = vmatpush2.bf16.msra.mxu0 %v353
  %473 = vmatprep.subr.bf16.mxu0 0
  %474 = vmatpush2.bf16.msra.mxu0 %v352
  %475 = vmatprep.subr.bf16.mxu0 0
  %476 = vmatpush2.bf16.msra.mxu0 %v351
  %477 = vmatprep.mubr.bf16.mxu0 %v36
  %478 = vmatmul.mubr.bf16.gmra.mxu0 %v35
  %v479 = vpop.f32.mrf.mxu0
  %v480 = vadd.f32 %v145, %v479
  %v481 = vpop.f32.mrf.mxu0
  %v482 = vpop.f32.mrf.mxu0
  %v483 = vadd.f32 %v145, %v482
  %v484 = vpop.f32.mrf.mxu0
  %485 = vdwg.mxu0
  %486 = vmatprep.subr.bf16.mxu0 0
  %487 = vmatpush1.bf16.msra.mxu0 %v366
  %488 = vmatprep.subr.bf16.mxu0 0
  %489 = vmatpush1.bf16.msra.mxu0 %v365
  %490 = vmatprep.subr.bf16.mxu0 0
  %491 = vmatpush1.bf16.msra.mxu0 %v364
  %492 = vmatprep.subr.bf16.mxu0 0
  %493 = vmatpush1.bf16.msra.mxu0 %v363
  %494 = vmatprep.subr.bf16.mxu0 0
  %495 = vmatpush1.bf16.msra.mxu0 %v362
  %496 = vmatprep.subr.bf16.mxu0 0
  %497 = vmatpush1.bf16.msra.mxu0 %v361
  %498 = vmatprep.subr.bf16.mxu0 0
  %499 = vmatpush1.bf16.msra.mxu0 %v360
  %500 = vmatprep.subr.bf16.mxu0 0
  %501 = vmatpush1.bf16.msra.mxu0 %v359
  %502 = vmatprep.subr.bf16.mxu0 0
  %503 = vmatpush2.bf16.msra.mxu0 %v374
  %504 = vmatprep.subr.bf16.mxu0 0
  %505 = vmatpush2.bf16.msra.mxu0 %v373
  %506 = vmatprep.subr.bf16.mxu0 0
  %507 = vmatpush2.bf16.msra.mxu0 %v372
  %508 = vmatprep.subr.bf16.mxu0 0
  %509 = vmatpush2.bf16.msra.mxu0 %v371
  %510 = vmatprep.subr.bf16.mxu0 0
  %511 = vmatpush2.bf16.msra.mxu0 %v370
  %512 = vmatprep.subr.bf16.mxu0 0
  %513 = vmatpush2.bf16.msra.mxu0 %v369
  %514 = vmatprep.subr.bf16.mxu0 0
  %515 = vmatpush2.bf16.msra.mxu0 %v368
  %516 = vmatprep.subr.bf16.mxu0 0
  %517 = vmatpush2.bf16.msra.mxu0 %v367
  %518 = vmatprep.mubr.bf16.mxu0 %v38
  %519 = vmatmul.mubr.bf16.gmra.mxu0 %v37
  %v520 = vpop.f32.mrf.mxu0
  %v521 = vadd.f32 %v480, %v520
  %v522 = vpop.f32.mrf.mxu0
  %v523 = vpop.f32.mrf.mxu0
  %v524 = vadd.f32 %v483, %v523
  %v525 = vpop.f32.mrf.mxu0
  %526 = vdwg.mxu0
  %527 = vmatprep.subr.bf16.mxu0 0
  %528 = vmatpush1.bf16.msra.mxu0 %v382
  %529 = vmatprep.subr.bf16.mxu0 0
  %530 = vmatpush1.bf16.msra.mxu0 %v381
  %531 = vmatprep.subr.bf16.mxu0 0
  %532 = vmatpush1.bf16.msra.mxu0 %v380
  %533 = vmatprep.subr.bf16.mxu0 0
  %534 = vmatpush1.bf16.msra.mxu0 %v379
  %535 = vmatprep.subr.bf16.mxu0 0
  %536 = vmatpush1.bf16.msra.mxu0 %v378
  %537 = vmatprep.subr.bf16.mxu0 0
  %538 = vmatpush1.bf16.msra.mxu0 %v377
  %539 = vmatprep.subr.bf16.mxu0 0
  %540 = vmatpush1.bf16.msra.mxu0 %v376
  %541 = vmatprep.subr.bf16.mxu0 0
  %542 = vmatpush1.bf16.msra.mxu0 %v375
  %543 = vmatprep.subr.bf16.mxu0 0
  %544 = vmatpush2.bf16.msra.mxu0 %v390
  %545 = vmatprep.subr.bf16.mxu0 0
  %546 = vmatpush2.bf16.msra.mxu0 %v389
  %547 = vmatprep.subr.bf16.mxu0 0
  %548 = vmatpush2.bf16.msra.mxu0 %v388
  %549 = vmatprep.subr.bf16.mxu0 0
  %550 = vmatpush2.bf16.msra.mxu0 %v387
  %551 = vmatprep.subr.bf16.mxu0 0
  %552 = vmatpush2.bf16.msra.mxu0 %v386
  %553 = vmatprep.subr.bf16.mxu0 0
  %554 = vmatpush2.bf16.msra.mxu0 %v385
  %555 = vmatprep.subr.bf16.mxu0 0
  %556 = vmatpush2.bf16.msra.mxu0 %v384
  %557 = vmatprep.subr.bf16.mxu0 0
  %558 = vmatpush2.bf16.msra.mxu0 %v383
  %559 = vmatprep.mubr.bf16.mxu0 %v40
  %560 = vmatmul.mubr.bf16.gmra.mxu0 %v39
  %v561 = vpop.f32.mrf.mxu0
  %v562 = vadd.f32 %v521, %v561
  %v563 = vpop.f32.mrf.mxu0
  %v564 = vpop.f32.mrf.mxu0
  %v565 = vadd.f32 %v524, %v564
  %v566 = vpop.f32.mrf.mxu0
  %567 = vdwg.mxu0
  %568 = vmatprep.subr.bf16.mxu0 0
  %569 = vmatpush1.bf16.msra.mxu0 0
  %570 = vmatprep.subr.bf16.mxu0 0
  %571 = vmatpush1.bf16.msra.mxu0 0
  %572 = vmatprep.subr.bf16.mxu0 0
  %573 = vmatpush1.bf16.msra.mxu0 0
  %574 = vmatprep.subr.bf16.mxu0 0
  %575 = vmatpush1.bf16.msra.mxu0 0
  %576 = vmatprep.subr.bf16.mxu0 0
  %577 = vmatpush1.bf16.msra.mxu0 0
  %578 = vmatprep.subr.bf16.mxu0 0
  %579 = vmatpush1.bf16.msra.mxu0 0
  %580 = vmatprep.subr.bf16.mxu0 0
  %581 = vmatpush1.bf16.msra.mxu0 0
  %582 = vmatprep.subr.bf16.mxu0 0
  %583 = vmatpush1.bf16.msra.mxu0 %v391
  %584 = vmatprep.subr.bf16.mxu0 0
  %585 = vmatpush2.bf16.msra.mxu0 0
  %586 = vmatprep.subr.bf16.mxu0 0
  %587 = vmatpush2.bf16.msra.mxu0 0
  %588 = vmatprep.subr.bf16.mxu0 0
  %589 = vmatpush2.bf16.msra.mxu0 0
  %590 = vmatprep.subr.bf16.mxu0 0
  %591 = vmatpush2.bf16.msra.mxu0 0
  %592 = vmatprep.subr.bf16.mxu0 0
  %593 = vmatpush2.bf16.msra.mxu0 0
  %594 = vmatprep.subr.bf16.mxu0 0
  %595 = vmatpush2.bf16.msra.mxu0 0
  %596 = vmatprep.subr.bf16.mxu0 0
  %597 = vmatpush2.bf16.msra.mxu0 0
  %598 = vmatprep.subr.bf16.mxu0 0
  %599 = vmatpush2.bf16.msra.mxu0 0
  %600 = vmatprep.mubr.bf16.mxu0 0
  %601 = vmatmul.mubr.bf16.gmra.mxu0 %v443
  %v602 = vpop.f32.mrf.mxu0
  %v603 = vadd.f32 %v562, %v602
  %v604 = vpop.f32.mrf.mxu0
  %v605 = vpop.f32.mrf.mxu0
  %v606 = vadd.f32 %v565, %v605
  %v607 = vpop.f32.mrf.mxu0
  %608 = vdwg.mxu0
  %v609 = vmax.f32 %v603, 0.0
  %v610 = vmax.f32 %v606, 0.0
  %v611 = vpack.c.bf16 %v610, %v609
  %v612 = vld [vmem:[%s3] sm:$0xf]
  %v613 = vld [vmem:[%s3 + $0x4] sm:$0xf]
  %v614 = vld [vmem:[%s3 + $0x8] sm:$0xf]
  %v615 = vld [vmem:[%s3 + $0xc] sm:$0xf]
  %v616 = vld [vmem:[%s3 + $0x10] sm:$0xf]
  %v617 = vld [vmem:[%s3 + $0x14] sm:$0xf]
  %v618 = vld [vmem:[%s3 + $0x18] sm:$0xf]
  %v619 = vld [vmem:[%s3 + $0x1c] sm:$0xf]
  %v620 = vld [vmem:[%s3 + $0x20] sm:$0xf]
  %v621 = vld [vmem:[%s3 + $0x24] sm:$0xf]
  %v622 = vld [vmem:[%s3 + $0x28] sm:$0xf]
  %v623 = vld [vmem:[%s3 + $0x2c] sm:$0xf]
  %v624 = vld [vmem:[%s3 + $0x30] sm:$0xf]
  %v625 = vld [vmem:[%s3 + $0x34] sm:$0xf]
  %v626 = vld [vmem:[%s3 + $0x38] sm:$0xf]
  %v627 = vld [vmem:[%s3 + $0x3c] sm:$0xf]
  %v628 = vld [vmem:[%s4] sm:$0x1]
  %v630 = vlaneseq
  %v631 = vshrl.u32 %v630, 7
  %v632 = vsub.s32 0, %v631
  %v633 = vrot.slane %v628, %v632
  %v651 = vunpack.c.l.b16 %v612
  %v652 = vunpack.c.l.b16 %v613
  %v653 = vunpack.c.l.b16 %v614
  %v654 = vunpack.c.l.b16 %v615
  %v655 = vunpack.c.l.b16 %v616
  %v656 = vunpack.c.l.b16 %v617
  %v657 = vunpack.c.l.b16 %v618
  %v658 = vunpack.c.l.b16 %v619
  %v659 = vunpack.c.l.b16 %v620
  %v660 = vunpack.c.l.b16 %v621
  %v661 = vunpack.c.l.b16 %v622
  %v662 = vunpack.c.l.b16 %v623
  %v663 = vunpack.c.l.b16 %v624
  %v664 = vunpack.c.l.b16 %v625
  %v665 = vunpack.c.l.b16 %v626
  %v666 = vunpack.c.l.b16 %v627
  %v667 = vpack.c.b16 %v652, %v651
  %v668 = vpack.c.b16 %v654, %v653
  %v669 = vpack.c.b16 %v656, %v655
  %v670 = vpack.c.b16 %v658, %v657
  %v671 = vpack.c.b16 %v660, %v659
  %v672 = vpack.c.b16 %v662, %v661
  %v673 = vpack.c.b16 %v664, %v663
  %v674 = vpack.c.b16 %v666, %v665
  %683 = vmatprep.subr.bf16.mxu0 0
  %684 = vmatpush1.bf16.msra.mxu0 %v674
  %685 = vmatprep.subr.bf16.mxu0 0
  %686 = vmatpush1.bf16.msra.mxu0 %v673
  %687 = vmatprep.subr.bf16.mxu0 0
  %688 = vmatpush1.bf16.msra.mxu0 %v672
  %689 = vmatprep.subr.bf16.mxu0 0
  %690 = vmatpush1.bf16.msra.mxu0 %v671
  %691 = vmatprep.subr.bf16.mxu0 0
  %692 = vmatpush1.bf16.msra.mxu0 %v670
  %693 = vmatprep.subr.bf16.mxu0 0
  %694 = vmatpush1.bf16.msra.mxu0 %v669
  %695 = vmatprep.subr.bf16.mxu0 0
  %696 = vmatpush1.bf16.msra.mxu0 %v668
  %697 = vmatprep.subr.bf16.mxu0 0
  %698 = vmatpush1.bf16.msra.mxu0 %v667
  %699 = vmatprep.subr.bf16.mxu0 0
  %700 = vmatpush2.bf16.msra.mxu0 0
  %701 = vmatprep.subr.bf16.mxu0 0
  %702 = vmatpush2.bf16.msra.mxu0 0
  %703 = vmatprep.subr.bf16.mxu0 0
  %704 = vmatpush2.bf16.msra.mxu0 0
  %705 = vmatprep.subr.bf16.mxu0 0
  %706 = vmatpush2.bf16.msra.mxu0 0
  %707 = vmatprep.subr.bf16.mxu0 0
  %708 = vmatpush2.bf16.msra.mxu0 0
  %709 = vmatprep.subr.bf16.mxu0 0
  %710 = vmatpush2.bf16.msra.mxu0 0
  %711 = vmatprep.subr.bf16.mxu0 0
  %712 = vmatpush2.bf16.msra.mxu0 0
  %713 = vmatprep.subr.bf16.mxu0 0
  %714 = vmatpush2.bf16.msra.mxu0 0
  %715 = vmatprep.mubr.bf16.mxu0 0
  %716 = vmatmul.mubr.bf16.gmra.mxu0 %v611
  %v717 = vpop.f32.mrf.mxu0
  %v718 = vadd.f32 %v633, %v717
  %v719 = vpop.f32.mrf.mxu0
  %v720 = vpop.f32.mrf.mxu0
  %v721 = vadd.f32 %v633, %v720
  %v722 = vpop.f32.mrf.mxu0
  %723 = vdwg.mxu0
  %v724 = vpack.c.bf16 %v721, %v718
  %v726 = vunpack.c.l.b16 %v724
  %v727 = vunpack.c.h.b16 %v724
  %v728 = vpack.c.b16 %v726, %v726
  %v729 = vpack.c.b16 %v727, %v727
  %732 = vst [vmem:[%s5] sm:$0xf] %v728
  %733 = vst [vmem:[%s5 + $0x4] sm:$0xf] %v729
  // Predicated region
  $region22: #{mnist_model_forward.1} parent=0 // pred_check
    _
  $region23: #{mnist_model_forward.1} parent=0 // pred_check_branch
    %735 = sbr.rel (0) target = $region25
  $region24: #{mnist_model_forward.1} parent=0 // pred_region
    _
  $region25: #{mnist_model_forward.1} parent=0 // pred_fallthru
    _
  // Predicated region
  $region26: #{mnist_model_forward.1} parent=0 // pred_check
    _
  $region27: #{mnist_model_forward.1} parent=0 // pred_check_branch
    %737 = sbr.rel (0) target = $region29
  $region28: #{mnist_model_forward.1} parent=0 // pred_region
    _
  $region29: #{mnist_model_forward.1} parent=0 // pred_fallthru
    _

</llo_original>
